<compile_context>
chip_gen: v7x
topology: tpu7x:2x2x1
jax: 0.10.0
libtpu: 0.0.40
codegen_flags: <defaults>
</compile_context>

<pallas_src>
import functools

import jax
import jax.numpy as jnp
from jax import lax
from jax.experimental import pallas as pl
from jax.experimental.pallas import tpu as pltpu

_LANES = 128        # vreg lane width
_BM_MAX = 8192      # rows per grid step  -> 4 MiB f32 block per input
_CHUNK = 512        # rows per in-kernel compute chunk -> ~256 KiB temporaries
_LN2 = 0.6931471805599453


def _round_up(x, m):
    return ((x + m - 1) // m) * m


def _stable_logcosh_f32(d):
    # log(cosh(d)) == |d| + log1p(exp(-2|d|)) - ln 2   (overflow-free form)
    a = jnp.abs(d)
    return a + jnp.log1p(jnp.exp(-2.0 * a)) - _LN2


def _detect_num_tensorcores():
    """Best-effort TensorCore count; returns None if it cannot be determined."""
    try:
        info = pltpu.get_tpu_info()
    except Exception:
        return None
    for name in ("num_cores", "core_count", "num_tensorcores",
                 "tensor_core_count", "num_tensor_cores"):
        v = getattr(info, name, None)
        if v is None:
            continue
        try:
            v = int(v)
        except (TypeError, ValueError):
            continue
        if v > 0:
            return v
    return None


def _logcosh_partial_kernel(y_ref, yp_ref, o_ref, acc_ref, *,
                            rows, bm, bpc, nblocks, chunk):
    """Per-core partial sums of log(cosh(y - y' + 1e-12)).

    The running partial lives in lane row 0 of an (8, 128) accumulator slab
    (rows 1..7 stay zero) so the output block shape satisfies the (8, 128)
    tiling rule without any cross-sublane finalize work.
    """
    c = pl.program_id(0)      # partial-sum / core index  ("parallel")
    j = pl.program_id(1)      # row-block index per core  ("arbitrary")

    @pl.when(j == 0)
    def _init():
        acc_ref[...] = jnp.zeros_like(acc_ref)

    blk = c * bpc + j
    nchunks = bm // chunk     # static

    def chunk_partial(r0, lim):
        d = (y_ref[pl.ds(r0, chunk), :].astype(jnp.float32)
             - yp_ref[pl.ds(r0, chunk), :].astype(jnp.float32)) + 1e-12
        lc = _stable_logcosh_f32(d)
        if lim is not None:   # masked (boundary) path only
            rid = lax.broadcasted_iota(jnp.int32, (chunk, _LANES), 0)
            lc = jnp.where(rid < lim, lc, 0.0)
        return jnp.sum(lc, axis=0, keepdims=True)        # (1, 128)

    def accumulate(limit):
        if nchunks == 1:
            total = chunk_partial(0, limit)
        else:
            def body(i, carry):
                r0 = pl.multiple_of(i * chunk, chunk)
                lim = None if limit is None else limit - i * chunk
                return carry + chunk_partial(r0, lim)
            total = lax.fori_loop(0, nchunks, body,
                                  jnp.zeros((1, _LANES), jnp.float32))
        acc_ref[0:1, :] += total

    # Fast path: interior blocks are always fully valid -> no mask math.
    @pl.when(blk < nblocks - 1)
    def _interior():
        accumulate(None)

    # Slow path: the last valid block (possibly ragged rows) and, for an odd
    # block count under the 2-way split, the clamped duplicate block (which is
    # fully masked and contributes zero).
    @pl.when(blk >= nblocks - 1)
    def _boundary():
        accumulate(jnp.maximum(rows - blk * bm, 0))

    @pl.when(j == bpc - 1)
    def _finalize():
        o_ref[...] = acc_ref[...]      # lane-dense (8, 128) per-core partial


def log_cosh_loss(y_t, y_prime_t):
    """JAX/Pallas equivalent of LogCoshLoss.forward(y_t, y_prime_t)."""
    assert y_t.shape == y_prime_t.shape, "shapes must match (elementwise loss)"
    n = y_t.size

    # Flatten (free for contiguous arrays). Native dtype is kept: the kernel
    # casts in-register, so bf16 inputs only move half the HBM bytes.
    yf = jnp.ravel(y_t)
    ypf = jnp.ravel(y_prime_t)

    # Lane-ragged tail (< 128 elems): fold it in with plain JAX instead of
    # jnp.pad-ing both inputs (which would materialize full HBM copies for a
    # purely memory-bound kernel). Aligned inputs take the zero-copy path.
    rem = n % _LANES
    n_main = n - rem
    tail_sum = 0.0
    if rem:
        dt = (yf[n_main:].astype(jnp.float32)
              - ypf[n_main:].astype(jnp.float32)) + 1e-12
        tail_sum = jnp.sum(_stable_logcosh_f32(dt))
        yf, ypf = yf[:n_main], ypf[:n_main]

    if n_main == 0:
        return tail_sum / jnp.float32(n)

    rows = n_main // _LANES
    y2 = yf.reshape(rows, _LANES)          # free reshape: row-major contiguous
    yp2 = ypf.reshape(rows, _LANES)

    # Row-block size: the whole array if it fits a single block, else 8192
    # rows. 8192-row f32 blocks => 16 MiB of double-buffered inputs + ~1.5 MiB
    # of chunked temporaries, under the 32 MiB scoped-VMEM limit set below
    # (safe on v5e/v6e/v7x) while amortizing per-grid-step overhead.
    if rows <= _CHUNK:
        bm, chunk = rows, rows                         # tiny: one full block
    elif rows <= _BM_MAX:
        bm, chunk = _round_up(rows, _CHUNK), _CHUNK    # one (padded) block
    else:
        bm, chunk = _BM_MAX, _CHUNK
    nblocks = pl.cdiv(rows, bm)

    # Split row-blocks into (up to) two independent partial sums so 2-TC parts
    # (megacore / v7x) can shard the leading "parallel" axis; single-TC chips
    # skip the split unless it costs (almost) nothing. CORE_PARALLEL is not
    # used to stay portable across single-core generations.
    cores = _detect_num_tensorcores()
    if nblocks < 2 or cores == 1:
        ncores = 1
    elif cores is not None and cores >= 2:
        ncores = 2
    else:   # unknown core count: split only when the duplicate block is free/cheap
        ncores = 2 if (nblocks % 2 == 0 or nblocks >= 8) else 1
    bpc = pl.cdiv(nblocks, ncores)         # row-blocks per partial sum

    def in_map(c, j):
        # Clamp so core 1's duplicated final step (odd nblocks) never addresses
        # a block past the array; its contribution is masked to zero in-kernel.
        return (jnp.minimum(c * bpc + j, nblocks - 1), 0)

    kernel = functools.partial(_logcosh_partial_kernel, rows=rows, bm=bm,
                               bpc=bpc, nblocks=nblocks, chunk=chunk)

    partials = pl.pallas_call(
        kernel,
        out_shape=jax.ShapeDtypeStruct((ncores * 8, _LANES), jnp.float32),
        grid_spec=pltpu.PrefetchScalarGridSpec(
            num_scalar_prefetch=0,
            grid=(ncores, bpc),
            in_specs=[
                pl.BlockSpec((bm, _LANES), in_map),
                pl.BlockSpec((bm, _LANES), in_map),
            ],
            # one resident (8, 128) slab per partial sum, written on its last step
            out_specs=pl.BlockSpec((8, _LANES), lambda c, j: (c, 0)),
            scratch_shapes=[pltpu.VMEM((8, _LANES), jnp.float32)],
        ),
        compiler_params=pltpu.CompilerParams(
            dimension_semantics=("parallel", "arbitrary"),
            vmem_limit_bytes=32 * 1024 * 1024,
        ),
    )(y2, yp2)

    # mean = (kernel partials + ragged tail) / true element count (glue only)
    return (jnp.sum(partials) + tail_sum) / jnp.float32(n)


def vae_forward(x, encoder, decoder):
    """Mirror of VAE.forward: pure composition of injected submodules."""
    # TODO(synk): encoder/decoder are injected nn.Modules not defined in the
    # spec, so there is no concrete compute here to kernelize; only the file's
    # concrete LogCoshLoss reduction is implemented as a Pallas kernel above.
    z_mean, z_log_var, z = encoder(x)
    reconstruction = decoder(z)
    return (z_mean, z_log_var, reconstruction)


if __name__ == "__main__":
    key = jax.random.PRNGKey(0)
    k1, k2 = jax.random.split(key)

    # Small image-like shapes, NCHW: batch=2, channels=4, 16x16 spatial.
    y_t = jax.random.normal(k1, (2, 4, 16, 16), dtype=jnp.float32)        # reconstruction
    y_prime_t = jax.random.normal(k2, (2, 4, 16, 16), dtype=jnp.float32)  # original

    loss = log_cosh_loss(y_t, y_prime_t)
    loss = jax.block_until_ready(loss)

    # Sanity check against a plain-JAX reference of the PyTorch semantics.
    ref = jnp.mean(jnp.log(jnp.cosh((y_t - y_prime_t) + 1e-12)))
    assert jnp.allclose(loss, ref, rtol=1e-5, atol=1e-6), (loss, ref)

    print("KERNEL_OK")
</pallas_src>

<mosaic_0001>
module attributes {stable_mosaic.version = 11 : i64} {
  func.func @_logcosh_partial_kernel(%arg0: i32, %arg1: i32, %arg2: memref<16x128xf32, #tpu.memory_space<vmem>>, %arg3: memref<16x128xf32, #tpu.memory_space<vmem>>, %arg4: memref<8x128xf32, #tpu.memory_space<vmem>>, %arg5: memref<8x128xf32, #tpu.memory_space<vmem>>) attributes {dimension_semantics = [#tpu.dimension_semantics<parallel>, #tpu.dimension_semantics<arbitrary>], iteration_bounds = array<i64: 1, 1>, scalar_prefetch = 0 : i64, scratch_operands = 1 : i64, tpu.core_type = #tpu.core_type<tc>, window_params = [{transform_indices = @transform_0, window_bounds = array<i64: 16, 128>}, {transform_indices = @transform_1, window_bounds = array<i64: 16, 128>}, {transform_indices = @transform_2, window_bounds = array<i64: 8, 128>}]} {
    %c0_i32 = arith.constant 0 : i32
    %0 = arith.cmpi eq, %arg1, %c0_i32 : i32
    %1 = arith.extui %0 : i1 to i32
    %c0_i32_0 = arith.constant 0 : i32
    %2 = arith.cmpi ne, %1, %c0_i32_0 : i32
    scf.if %2 {
      %cst = arith.constant 0.000000e+00 : f32
      %14 = vector.broadcast %cst : f32 to vector<8x128xf32>
      %c0 = arith.constant 0 : index
      %c0_7 = arith.constant 0 : index
      %15 = vector.load %arg5[%c0, %c0_7] : memref<8x128xf32, #tpu.memory_space<vmem>>, vector<8x128xf32>
      tpu.vector_store %arg5[%c0, %c0_7], %14 {strides = array<i32>} : memref<8x128xf32, #tpu.memory_space<vmem>>, vector<8x128xf32>,
    } else {
    }
    %c1_i32 = arith.constant 1 : i32
    %3 = arith.muli %arg0, %c1_i32 : i32
    %4 = arith.addi %3, %arg1 : i32
    %c0_i32_1 = arith.constant 0 : i32
    %5 = arith.cmpi slt, %4, %c0_i32_1 : i32
    %6 = arith.extui %5 : i1 to i32
    %c0_i32_2 = arith.constant 0 : i32
    %7 = arith.cmpi ne, %6, %c0_i32_2 : i32
    scf.if %7 {
      %c0 = arith.constant 0 : index
      %c0_7 = arith.constant 0 : index
      %14 = vector.load %arg2[%c0, %c0_7] : memref<16x128xf32, #tpu.memory_space<vmem>>, vector<16x128xf32>
      %c0_8 = arith.constant 0 : index
      %c0_9 = arith.constant 0 : index
      %15 = vector.load %arg3[%c0_8, %c0_9] : memref<16x128xf32, #tpu.memory_space<vmem>>, vector<16x128xf32>
      %16 = arith.subf %14, %15 : vector<16x128xf32>
      %cst = arith.constant 9.99999996E-13 : f32
      %17 = vector.broadcast %cst : f32 to vector<16x128xf32>
      %18 = arith.addf %16, %17 : vector<16x128xf32>
      %19 = math.absf %18 : vector<16x128xf32>
      %cst_10 = arith.constant -2.000000e+00 : f32
      %20 = vector.broadcast %cst_10 : f32 to vector<16x128xf32>
      %21 = arith.mulf %20, %19 : vector<16x128xf32>
      %22 = math.exp %21 : vector<16x128xf32>
      %23 = math.log1p %22 : vector<16x128xf32>
      %24 = arith.addf %19, %23 : vector<16x128xf32>
      %cst_11 = arith.constant 0.693147182 : f32
      %25 = vector.broadcast %cst_11 : f32 to vector<16x128xf32>
      %26 = arith.subf %24, %25 : vector<16x128xf32>
      %cst_12 = arith.constant dense<0.000000e+00> : vector<128xf32>
      %27 = vector.multi_reduction <add>, %26, %cst_12 [0] : vector<16x128xf32> to vector<128xf32>
      %28 = vector.shape_cast %27 : vector<128xf32> to vector<1x128xf32>
      %c0_13 = arith.constant 0 : index
      %c0_14 = arith.constant 0 : index
      %29 = vector.load %arg5[%c0_13, %c0_14] : memref<8x128xf32, #tpu.memory_space<vmem>>, vector<1x128xf32>
      %30 = arith.addf %29, %28 : vector<1x128xf32>
      %c0_15 = arith.constant 0 : index
      %c0_16 = arith.constant 0 : index
      %31 = vector.load %arg5[%c0_15, %c0_16] : memref<8x128xf32, #tpu.memory_space<vmem>>, vector<1x128xf32>
      tpu.vector_store %arg5[%c0_15, %c0_16], %30 {strides = array<i32>} : memref<8x128xf32, #tpu.memory_space<vmem>>, vector<1x128xf32>,
    } else {
    }
    %c0_i32_3 = arith.constant 0 : i32
    %8 = arith.cmpi sge, %4, %c0_i32_3 : i32
    %9 = arith.extui %8 : i1 to i32
    %c0_i32_4 = arith.constant 0 : i32
    %10 = arith.cmpi ne, %9, %c0_i32_4 : i32
    scf.if %10 {
      %c16_i32 = arith.constant 16 : i32
      %14 = arith.muli %4, %c16_i32 : i32
      %c16_i32_7 = arith.constant 16 : i32
      %15 = arith.subi %c16_i32_7, %14 : i32
      %c0_i32_8 = arith.constant 0 : i32
      %16 = arith.maxsi %15, %c0_i32_8 : i32
      %c0 = arith.constant 0 : index
      %c0_9 = arith.constant 0 : index
      %17 = vector.load %arg2[%c0, %c0_9] : memref<16x128xf32, #tpu.memory_space<vmem>>, vector<16x128xf32>
      %c0_10 = arith.constant 0 : index
      %c0_11 = arith.constant 0 : index
      %18 = vector.load %arg3[%c0_10, %c0_11] : memref<16x128xf32, #tpu.memory_space<vmem>>, vector<16x128xf32>
      %19 = arith.subf %17, %18 : vector<16x128xf32>
      %cst = arith.constant 9.99999996E-13 : f32
      %20 = vector.broadcast %cst : f32 to vector<16x128xf32>
      %21 = arith.addf %19, %20 : vector<16x128xf32>
      %22 = math.absf %21 : vector<16x128xf32>
      %cst_12 = arith.constant -2.000000e+00 : f32
      %23 = vector.broadcast %cst_12 : f32 to vector<16x128xf32>
      %24 = arith.mulf %23, %22 : vector<16x128xf32>
      %25 = math.exp %24 : vector<16x128xf32>
      %26 = math.log1p %25 : vector<16x128xf32>
      %27 = arith.addf %22, %26 : vector<16x128xf32>
      %cst_13 = arith.constant 0.693147182 : f32
      %28 = vector.broadcast %cst_13 : f32 to vector<16x128xf32>
      %29 = arith.subf %27, %28 : vector<16x128xf32>
      %30 = tpu.iota {dimensions = array<i32: 0>} : vector<16x128xi32>
      %31 = vector.broadcast %16 : i32 to vector<16x128xi32>
      %32 = arith.cmpi slt, %30, %31 : vector<16x128xi32>
      %cst_14 = arith.constant 0.000000e+00 : f32
      %33 = vector.broadcast %cst_14 : f32 to vector<16x128xf32>
      %34 = arith.select %32, %29, %33 : vector<16x128xi1>, vector<16x128xf32>
      %cst_15 = arith.constant dense<0.000000e+00> : vector<128xf32>
      %35 = vector.multi_reduction <add>, %34, %cst_15 [0] : vector<16x128xf32> to vector<128xf32>
      %36 = vector.shape_cast %35 : vector<128xf32> to vector<1x128xf32>
      %c0_16 = arith.constant 0 : index
      %c0_17 = arith.constant 0 : index
      %37 = vector.load %arg5[%c0_16, %c0_17] : memref<8x128xf32, #tpu.memory_space<vmem>>, vector<1x128xf32>
      %38 = arith.addf %37, %36 : vector<1x128xf32>
      %c0_18 = arith.constant 0 : index
      %c0_19 = arith.constant 0 : index
      %39 = vector.load %arg5[%c0_18, %c0_19] : memref<8x128xf32, #tpu.memory_space<vmem>>, vector<1x128xf32>
      tpu.vector_store %arg5[%c0_18, %c0_19], %38 {strides = array<i32>} : memref<8x128xf32, #tpu.memory_space<vmem>>, vector<1x128xf32>,
    } else {
    }
    %c0_i32_5 = arith.constant 0 : i32
    %11 = arith.cmpi eq, %arg1, %c0_i32_5 : i32
    %12 = arith.extui %11 : i1 to i32
    %c0_i32_6 = arith.constant 0 : i32
    %13 = arith.cmpi ne, %12, %c0_i32_6 : i32
    scf.if %13 {
      %c0 = arith.constant 0 : index
      %c0_7 = arith.constant 0 : index
      %14 = vector.load %arg5[%c0, %c0_7] : memref<8x128xf32, #tpu.memory_space<vmem>>, vector<8x128xf32>
      %c0_8 = arith.constant 0 : index
      %c0_9 = arith.constant 0 : index
      %15 = vector.load %arg4[%c0_8, %c0_9] : memref<8x128xf32, #tpu.memory_space<vmem>>, vector<8x128xf32>
      tpu.vector_store %arg4[%c0_8, %c0_9], %14 {strides = array<i32>} : memref<8x128xf32, #tpu.memory_space<vmem>>, vector<8x128xf32>,
    } else {
    }
    return
  }
  func.func @transform_0(%arg0: i32, %arg1: i32) -> (i32, i32) {
    %c1_i32 = arith.constant 1 : i32
    %0 = arith.muli %arg0, %c1_i32 : i32
    %1 = arith.addi %0, %arg1 : i32
    %c0_i32 = arith.constant 0 : i32
    %2 = arith.minsi %1, %c0_i32 : i32
    %c0_i32_0 = arith.constant 0 : i32
    %c0_i32_1 = arith.constant 0 : i32
    return %2, %c0_i32_0 : i32, i32
  }
  func.func @transform_1(%arg0: i32, %arg1: i32) -> (i32, i32) {
    %c1_i32 = arith.constant 1 : i32
    %0 = arith.muli %arg0, %c1_i32 : i32
    %1 = arith.addi %0, %arg1 : i32
    %c0_i32 = arith.constant 0 : i32
    %2 = arith.minsi %1, %c0_i32 : i32
    %c0_i32_0 = arith.constant 0 : i32
    %c0_i32_1 = arith.constant 0 : i32
    return %2, %c0_i32_0 : i32, i32
  }
  func.func @transform_2(%arg0: i32, %arg1: i32) -> (i32, i32) {
    %c0_i32 = arith.constant 0 : i32
    %c0_i32_0 = arith.constant 0 : i32
    return %arg0, %c0_i32 : i32, i32
  }
}

</mosaic_0001>

<llo_original>
// kernel: tpu_custom_call.1
$region0: #{tpu_custom_call.1}
  #allocation0 [shape = 'u32[]', space=smem, size = 0x4, offset = 0x4, fixed_abs, tag = 'smem constant byte address 0x4 - core index']
  #allocation1 [shape = 'u32[144,128]{1,0:T(1,128)}', space=vmem, size = 0x12000, scoped, tag = 'internal scratch']
  #allocation2 [shape = 'f32[8,128]{1,0:T(8,128)}', space=vmem, size = 0x1000, scoped, tag = 'scratch operand']
  %s0 = inlined_call_operand.hbm [shape: f32[16,128], index: 0, kind: input, shape index: {}]
  %s1 = inlined_call_operand.hbm [shape: f32[16,128], index: 1, kind: input, shape index: {}]
  %s2 = inlined_call_operand.hbm [shape: f32[8,128], index: 2, kind: output, shape index: {}]
  %s3 = sld [smem:[#allocation0]]
  $region42: #{tpu_custom_call.1} parent=0
    _
  %s5 = ssub.s32 1, %s3
  %s6 = scalar_select 0, %s5, %s3
  $region1: #{tpu_custom_call.1} parent=0
    #allocation3 [shape = 'u8[8192]{0}', space=vmem, size = 0x2000, scoped, tag = 'input window, operand 0, single buffered']
    #allocation4 [shape = 's32[1]{0}', space=sflag, size = 0x4, scoped, tag = 'scoped memory for tpu_custom_call.1']
    #allocation5 [shape = 's32[1]{0}', space=sflag, size = 0x4, scoped, tag = 'scoped memory for tpu_custom_call.1']
    #allocation6 [shape = 'u8[8192]{0}', space=vmem, size = 0x2000, scoped, tag = 'input window, operand 1, single buffered']
    #allocation7 [shape = 's32[1]{0}', space=sflag, size = 0x4, scoped, tag = 'scoped memory for tpu_custom_call.1']
    #allocation8 [shape = 'u8[4096]{0}', space=vmem, size = 0x1000, scoped, tag = 'output window, operand 0, single buffered']
    %7 = vsyncpa [#allocation4], 0
    %8 = vsyncpa [#allocation7], 0
    %9 = vsyncpa [#allocation5], 0
    // Predicated region
    $region2: #{tpu_custom_call.1} parent=1 // pred_check
      _
    $region3: #{tpu_custom_call.1} parent=1 // pred_check_branch
      %11 = sbr.rel (0) target = $region5
    $region4: #{tpu_custom_call.1} parent=1 // pred_region
      %s12 = sadd.s32 0, 0
      %p13 = scmp.lt.s32.totalorder %s12, 0
      %s14 = scalar_select %p13, %s12, 0
      %s15 = smul.u32 2, %s14
      %s17 = ssub.s32 256, 256
      %18 = vsyncadd [#allocation4], %s17
      %s19 = smul.addr %s15, 128
      %s20 = scalar_lea.hbm %s0, %s19
      %s21 = sshll.u32 [#allocation3], 4
      %s22 = int_to_ptr.vmem [resolvable:$true] %s21
      %27 = dma.hbm_to_vmem [thread:$0]  %s20, 256, %s22, [#allocation4], 128, 128, 8
    $region5: #{tpu_custom_call.1} parent=1 // pred_fallthru
      _
    // Predicated region
    $region6: #{tpu_custom_call.1} parent=1 // pred_check
      _
    $region7: #{tpu_custom_call.1} parent=1 // pred_check_branch
      %29 = sbr.rel (0) target = $region9
    $region8: #{tpu_custom_call.1} parent=1 // pred_region
      %s30 = sadd.s32 0, 0
      %p31 = scmp.lt.s32.totalorder %s30, 0
      %s32 = scalar_select %p31, %s30, 0
      %s33 = smul.u32 2, %s32
      %s35 = ssub.s32 256, 256
      %36 = vsyncadd [#allocation7], %s35
      %s37 = smul.addr %s33, 128
      %s38 = scalar_lea.hbm %s1, %s37
      %s39 = sshll.u32 [#allocation6], 4
      %s40 = int_to_ptr.vmem [resolvable:$true] %s39
      %45 = dma.hbm_to_vmem [thread:$0]  %s38, 256, %s40, [#allocation7], 128, 128, 8
    $region9: #{tpu_custom_call.1} parent=1 // pred_fallthru
      _
    // Predicated region
    $region10: #{tpu_custom_call.1} parent=1 // pred_check
      _
    $region11: #{tpu_custom_call.1} parent=1 // pred_check_branch
      %47 = sbr.rel (0) target = $region13
    $region12: #{tpu_custom_call.1} parent=1 // pred_region
      %48 = dma.done [#allocation4], 256
    $region13: #{tpu_custom_call.1} parent=1 // pred_fallthru
      _
    // Predicated region
    $region14: #{tpu_custom_call.1} parent=1 // pred_check
      _
    $region15: #{tpu_custom_call.1} parent=1 // pred_check_branch
      %50 = sbr.rel (0) target = $region17
    $region16: #{tpu_custom_call.1} parent=1 // pred_region
      %51 = dma.done [#allocation7], 256
    $region17: #{tpu_custom_call.1} parent=1 // pred_fallthru
      _
    %s52 = sadd.s32 0, 0
    %p53 = scmp.lt.s32.totalorder %s52, 0
    %s54 = scalar_select %p53, %s52, 0
    %s55 = smul.u32 2, %s54
    %s56 = sadd.s32 0, 0
    %p57 = scmp.lt.s32.totalorder %s56, 0
    %s58 = scalar_select %p57, %s56, 0
    %s59 = smul.u32 2, %s58
    %p60 = scmp.eq.s32.totalorder 0, 0
    // Predicated region
    $region18: #{tpu_custom_call.1} parent=1 // pred_check
      %p61 = pneg %p60
    $region19: #{tpu_custom_call.1} parent=1 // pred_check_branch
      %63 = sbr.rel (%p61) target = $region21
    $region20: #{tpu_custom_call.1} parent=1 // pred_region
      %64 = vst [vmem:[#allocation2] sm:$0xff] 0.0
    $region21: #{tpu_custom_call.1} parent=1 // pred_fallthru
      _
    %s65 = sadd.s32 0, 0
    %p66 = scmp.lt.s32.totalorder %s65, 0
    // Predicated region
    $region22: #{tpu_custom_call.1} parent=1 // pred_check
      %p67 = pneg %p66
    $region23: #{tpu_custom_call.1} parent=1 // pred_check_branch
      %69 = sbr.rel (%p67) target = $region25
    $region24: #{tpu_custom_call.1} parent=1 // pred_region
      %v70 = vld [vmem:[#allocation3] sm:$0xff]
      %v71 = vld [vmem:[#allocation3 + $0x8] sm:$0xff]
      %v72 = vld [vmem:[#allocation6] sm:$0xff]
      %v73 = vld [vmem:[#allocation6 + $0x8] sm:$0xff]
      %v74 = vsub.f32 %v70, %v72
      %v75 = vsub.f32 %v71, %v73
      %v76 = vadd.f32 %v74, 1e-12
      %v77 = vadd.f32 %v75, 1e-12
      %v78 = vand.u32 2147483647, %v76
      %v79 = vand.u32 2147483647, %v77
      %v80 = vmul.f32 %v78, -2.0
      %v81 = vmul.f32 %v79, -2.0
      %v82 = vmul.f32 %v80, 1.442695
      %v83 = vpow.pop %v82
      %v84 = vmul.f32 %v81, 1.442695
      %v85 = vpow.pop %v84
      %v86 = vadd.f32 %v83, 1.0
      %v87 = vlog2.pop %v86
      %v88 = vmul.f32 %v87, 0.6931472
      %v89 = vmul.f32 -0.5, %v83
      %v90 = vadd.f32 %v89, 1.0
      %v91 = vmul.f32 %v90, %v83
      %v92 = vand.u32 2147483647, %v83
      %vm93 = vcmp.lt.f32.partialorder %v92, 0.0004427343
      %v94 = vsel %vm93, %v91, %v88
      %v95 = vadd.f32 %v85, 1.0
      %v96 = vlog2.pop %v95
      %v97 = vmul.f32 %v96, 0.6931472
      %v98 = vmul.f32 -0.5, %v85
      %v99 = vadd.f32 %v98, 1.0
      %v100 = vmul.f32 %v99, %v85
      %v101 = vand.u32 2147483647, %v85
      %vm102 = vcmp.lt.f32.partialorder %v101, 0.0004427343
      %v103 = vsel %vm102, %v100, %v97
      %v104 = vadd.f32 %v78, %v94
      %v105 = vadd.f32 %v79, %v103
      %v106 = vsub.f32 %v104, 0.6931472
      %v107 = vsub.f32 %v105, 0.6931472
      %v108 = vadd.f32 %v106, %v107
      %v109 = vrot.slane %v108, 4
      %v110 = vadd.f32 %v108, %v109
      %v111 = vrot.slane %v110, 2
      %v112 = vadd.f32 %v110, %v111
      %v113 = vrot.slane %v112, 1
      %v114 = vadd.f32 %v112, %v113
      %v115 = vld [vmem:[#allocation2] sm:$0x1]
      %v116 = vadd.f32 %v115, %v114
      %117 = vst [vmem:[#allocation2] sm:$0x1] %v116
    $region25: #{tpu_custom_call.1} parent=1 // pred_fallthru
      _
    %p118 = scmp.ge.s32.totalorder %s65, 0
    // Predicated region
    $region26: #{tpu_custom_call.1} parent=1 // pred_check
      %p119 = pneg %p118
    $region27: #{tpu_custom_call.1} parent=1 // pred_check_branch
      %121 = sbr.rel (%p119) target = $region29
    $region28: #{tpu_custom_call.1} parent=1 // pred_region
      %s122 = smul.u32 %s65, 16
      %s123 = ssub.s32 16, %s122
      %p124 = scmp.gt.s32.totalorder %s123, 0
      %s125 = scalar_select %p124, %s123, 0
      %v126 = vld [vmem:[#allocation3] sm:$0xff]
      %v127 = vld [vmem:[#allocation3 + $0x8] sm:$0xff]
      %v128 = vld [vmem:[#allocation6] sm:$0xff]
      %v129 = vld [vmem:[#allocation6 + $0x8] sm:$0xff]
      %v130 = vsub.f32 %v126, %v128
      %v131 = vsub.f32 %v127, %v129
      %v132 = vadd.f32 %v130, 1e-12
      %v133 = vadd.f32 %v131, 1e-12
      %v134 = vand.u32 2147483647, %v132
      %v135 = vand.u32 2147483647, %v133
      %v136 = vmul.f32 %v134, -2.0
      %v137 = vmul.f32 %v135, -2.0
      %v138 = vmul.f32 %v136, 1.442695
      %v139 = vpow.pop %v138
      %v140 = vmul.f32 %v137, 1.442695
      %v141 = vpow.pop %v140
      %v142 = vadd.f32 %v139, 1.0
      %v143 = vlog2.pop %v142
      %v144 = vmul.f32 %v143, 0.6931472
      %v145 = vmul.f32 -0.5, %v139
      %v146 = vadd.f32 %v145, 1.0
      %v147 = vmul.f32 %v146, %v139
      %v148 = vand.u32 2147483647, %v139
      %vm149 = vcmp.lt.f32.partialorder %v148, 0.0004427343
      %v150 = vsel %vm149, %v147, %v144
      %v151 = vadd.f32 %v141, 1.0
      %v152 = vlog2.pop %v151
      %v153 = vmul.f32 %v152, 0.6931472
      %v154 = vmul.f32 -0.5, %v141
      %v155 = vadd.f32 %v154, 1.0
      %v156 = vmul.f32 %v155, %v141
      %v157 = vand.u32 2147483647, %v141
      %vm158 = vcmp.lt.f32.partialorder %v157, 0.0004427343
      %v159 = vsel %vm158, %v156, %v153
      %v160 = vadd.f32 %v134, %v150
      %v161 = vadd.f32 %v135, %v159
      %v162 = vsub.f32 %v160, 0.6931472
      %v163 = vsub.f32 %v161, 0.6931472
      %v164 = vlaneseq
      %v165 = vshrl.u32 %v164, 7
      %v166 = vadd.s32 %v165, 8
      %v167 = vstv %s125
      %vm168 = vcmp.lt.s32.totalorder %v165, %v167
      %vm169 = vcmp.lt.s32.totalorder %v166, %v167
      %v170 = vsel %vm168, %v162, 0.0
      %v171 = vsel %vm169, %v163, 0.0
      %v172 = vadd.f32 %v170, %v171
      %v173 = vrot.slane %v172, 4
      %v174 = vadd.f32 %v172, %v173
      %v175 = vrot.slane %v174, 2
      %v176 = vadd.f32 %v174, %v175
      %v177 = vrot.slane %v176, 1
      %v178 = vadd.f32 %v176, %v177
      %v179 = vld [vmem:[#allocation2] sm:$0x1]
      %v180 = vadd.f32 %v179, %v178
      %181 = vst [vmem:[#allocation2] sm:$0x1] %v180
    $region29: #{tpu_custom_call.1} parent=1 // pred_fallthru
      _
    // Predicated region
    $region30: #{tpu_custom_call.1} parent=1 // pred_check
      %p182 = pneg %p60
    $region31: #{tpu_custom_call.1} parent=1 // pred_check_branch
      %184 = sbr.rel (%p182) target = $region33
    $region32: #{tpu_custom_call.1} parent=1 // pred_region
      %v185 = vld [vmem:[#allocation2] sm:$0xff]
      %186 = vst [vmem:[#allocation8] sm:$0xff] %v185
    $region33: #{tpu_custom_call.1} parent=1 // pred_fallthru
      _
    // Predicated region
    $region34: #{tpu_custom_call.1} parent=1 // pred_check
      _
    $region35: #{tpu_custom_call.1} parent=1 // pred_check_branch
      %188 = sbr.rel (0) target = $region37
    $region36: #{tpu_custom_call.1} parent=1 // pred_region
      %s190 = ssub.s32 128, 128
      %191 = vsyncadd [#allocation5], %s190
      %s193 = sshll.u32 [#allocation8], 4
      %s194 = int_to_ptr.vmem [resolvable:$true] %s193
      %196 = dma.vmem_to_hbm [thread:$0]  %s194, 128, %s2, [#allocation5]
    $region37: #{tpu_custom_call.1} parent=1 // pred_fallthru
      _
    // Predicated region
    $region38: #{tpu_custom_call.1} parent=1 // pred_check
      _
    $region39: #{tpu_custom_call.1} parent=1 // pred_check_branch
      %198 = sbr.rel (0) target = $region41
    $region40: #{tpu_custom_call.1} parent=1 // pred_region
      %199 = dma.done [#allocation5], 128
    $region41: #{tpu_custom_call.1} parent=1 // pred_fallthru
      _
    %200 = vsyncpa [#allocation4], 1
    %201 = vsyncpa [#allocation7], 1
    %202 = vsyncpa [#allocation5], 1

</llo_original>
